<compile_context>
chip_gen: v6e
topology: v6e:2x2x1
jax: 0.10.0
libtpu: 0.0.40
codegen_flags: <defaults>
</compile_context>

<pallas_src>
import functools

import jax
import jax.numpy as jnp
from jax.experimental import pallas as pl
from jax.experimental.pallas import tpu as pltpu


# ---------------------------------------------------------------------------
# Kernels
# ---------------------------------------------------------------------------

def _fnn_resident_kernel(x_ref, w1_ref, b1_ref, w2_ref, b2_ref, o_ref,
                         *, compute_dtype):
    """Resident-W2 path: 1-D grid over batch tiles, weights grid-invariant."""
    # Cast x on the VPU (free filler under the MXU) instead of a separate
    # wrapper-side XLA cast pass over x in HBM.
    x = x_ref[...].astype(compute_dtype)
    h = jnp.dot(x, w1_ref[...], preferred_element_type=jnp.float32)
    h = jnp.maximum(h + b1_ref[...], 0.0).astype(compute_dtype)
    y = jnp.dot(h, w2_ref[...], preferred_element_type=jnp.float32)
    o_ref[...] = (y + b2_ref[...]).astype(o_ref.dtype)


def _fnn_streamed_kernel(x_ref, w1_ref, b1_ref, w2_ref, b2_ref, o_ref, h_ref,
                         *, compute_dtype):
    """Streamed-W2 path: grid = (batch_tiles, out_feature_tiles).

    The hidden activation (fc1 + bias + ReLU) is computed once per batch tile
    (j == 0) into VMEM scratch and reused for every output-feature tile.

    INVARIANT: grid axis 1 (j) must be the innermost, sequentially iterated
    ("arbitrary") axis so h_ref persists across the j sweep for a fixed i.
    The wrapper pins dimension_semantics=("parallel", "arbitrary") to match.
    """
    @pl.when(pl.program_id(1) == 0)
    def _():
        x = x_ref[...].astype(compute_dtype)
        h = jnp.dot(x, w1_ref[...], preferred_element_type=jnp.float32)
        h_ref[...] = jnp.maximum(h + b1_ref[...], 0.0).astype(h_ref.dtype)

    y = jnp.dot(h_ref[...], w2_ref[...], preferred_element_type=jnp.float32)
    o_ref[...] = (y + b2_ref[...]).astype(o_ref.dtype)


# ---------------------------------------------------------------------------
# Helpers
# ---------------------------------------------------------------------------

def _vmem_budget_bytes():
    """Physical VMEM per core minus headroom for compiler internal scratch."""
    try:
        cap = pltpu.get_tpu_info().vmem_capacity_bytes
    except Exception:
        cap = 64 * 2**20  # conservative (v7x-sized) fallback
    return int(cap) * 7 // 8


def _pick_tile(dim, requested, granularity):
    """Largest divisor of `dim` that is <= requested and a multiple of
    `granularity`; falls back to `dim` (full extent) if none exists."""
    t = (min(requested, dim) // granularity) * granularity
    while t >= granularity:
        if dim % t == 0:
            return t
        t -= granularity
    return dim


# ---------------------------------------------------------------------------
# Wrapper
# ---------------------------------------------------------------------------

def fnn_forward(x, w1_t, b1, w2_t, b2, *, block_batch=512, block_n=256,
                compute_dtype=jnp.bfloat16, w2_resident=None):
    """Fused two-layer MLP forward: relu(x @ W1 + b1) @ W2 + b2.

    x:    [B, inputs]            (kept in its own dtype; cast in-kernel)
    w1_t: [inputs, hiddens]      (pre-transposed from PyTorch (out,in) layout)
    b1:   [hiddens]
    w2_t: [hiddens, outputs]
    b2:   [outputs]
    compute_dtype: MXU operand dtype (bf16 default); accumulation is f32.
    w2_resident:   None = auto, True/False = force resident / streamed path.
    returns [B, outputs] in x.dtype
    """
    B, inputs = x.shape
    in1, hiddens = w1_t.shape
    h2, outputs = w2_t.shape
    assert in1 == inputs and h2 == hiddens

    out_dtype = x.dtype
    compute_dtype = jnp.dtype(compute_dtype)
    cdt = compute_dtype.itemsize
    xdt = jnp.dtype(x.dtype).itemsize
    odt = jnp.dtype(out_dtype).itemsize

    vmem_budget = _vmem_budget_bytes()

    # Weights are pre-cast (amortized across calls); x is NOT cast here.
    w1c = w1_t.astype(compute_dtype)
    w2c = w2_t.astype(compute_dtype)
    b1_2d = b1.reshape(1, hiddens).astype(jnp.float32)
    b2_2d = b2.reshape(1, outputs).astype(jnp.float32)

    def resident_vmem(bb):
        return (2 * bb * inputs * xdt            # x tile (double-buffered)
                + 2 * inputs * hiddens * cdt     # W1
                + 2 * hiddens * outputs * cdt    # W2 (resident)
                + 2 * bb * outputs * odt         # out tile
                + 8 * (hiddens + outputs)        # biases (f32)
                + 4 * bb * (hiddens + outputs))  # f32 intermediates

    def streamed_vmem(bb, bn):
        return (2 * bb * inputs * xdt
                + 2 * inputs * hiddens * cdt
                + 2 * hiddens * bn * cdt         # W2 tile
                + 2 * bb * bn * odt
                + 8 * (hiddens + bn)
                + bb * hiddens * cdt             # hidden scratch
                + 4 * bb * max(hiddens, bn))     # f32 intermediates

    if w2_resident is None:
        w2_resident = resident_vmem(min(block_batch, B)) <= (6 * vmem_budget) // 10

    flops = 2 * B * hiddens * (inputs + outputs)

    if w2_resident:
        # Prefer >= 4 batch tiles: pipelining across i + megacore sharding.
        bb_req = block_batch
        if B >= 32 and B // min(bb_req, B) < 4:
            bb_req = max(8, B // 4)
        bb = _pick_tile(B, bb_req, 8)
        grid = (B // bb,)

        est = resident_vmem(bb)
        vmem_limit = int(min(vmem_budget,
                             max(32 * 2**20, (est * 5) // 4 + (4 << 20))))
        cost = pl.CostEstimate(
            flops=flops, transcendentals=0,
            bytes_accessed=int(B * inputs * xdt + inputs * hiddens * cdt
                               + hiddens * outputs * cdt
                               + 4 * (hiddens + outputs)
                               + B * outputs * odt))

        grid_spec = pltpu.PrefetchScalarGridSpec(
            num_scalar_prefetch=0,
            grid=grid,
            in_specs=[
                pl.BlockSpec((bb, inputs), lambda i: (i, 0)),
                pl.BlockSpec((inputs, hiddens), lambda i: (0, 0)),
                pl.BlockSpec((1, hiddens), lambda i: (0, 0)),
                pl.BlockSpec((hiddens, outputs), lambda i: (0, 0)),
                pl.BlockSpec((1, outputs), lambda i: (0, 0)),
            ],
            out_specs=pl.BlockSpec((bb, outputs), lambda i: (i, 0)),
        )
        return pl.pallas_call(
            functools.partial(_fnn_resident_kernel, compute_dtype=compute_dtype),
            out_shape=jax.ShapeDtypeStruct((B, outputs), out_dtype),
            grid_spec=grid_spec,
            compiler_params=pltpu.CompilerParams(
                dimension_semantics=("parallel",),
                vmem_limit_bytes=vmem_limit),
            cost_estimate=cost,
        )(x, w1c, b1_2d, w2c, b2_2d)

    # ---- Streamed-W2 path -------------------------------------------------
    bb = _pick_tile(B, block_batch, 8)
    bn = _pick_tile(outputs, block_n, 128)
    # Shrink the batch tile if the estimate would not fit the VMEM budget.
    while bb > 8 and streamed_vmem(bb, bn) > (7 * vmem_budget) // 10:
        new_bb = _pick_tile(B, bb // 2, 8)
        if new_bb >= bb:
            break
        bb = new_bb
    grid = (B // bb, outputs // bn)
    batch_tiles = grid[0]

    est = streamed_vmem(bb, bn)
    vmem_limit = int(min(vmem_budget,
                         max(32 * 2**20, (est * 5) // 4 + (4 << 20))))
    cost = pl.CostEstimate(
        flops=flops, transcendentals=0,
        bytes_accessed=int(B * inputs * xdt + inputs * hiddens * cdt
                           + batch_tiles * hiddens * outputs * cdt  # W2 re-read
                           + 4 * (hiddens + batch_tiles * outputs)
                           + B * outputs * odt))

    grid_spec = pltpu.PrefetchScalarGridSpec(
        num_scalar_prefetch=0,
        grid=grid,
        in_specs=[
            pl.BlockSpec((bb, inputs), lambda i, j: (i, 0)),
            pl.BlockSpec((inputs, hiddens), lambda i, j: (0, 0)),
            pl.BlockSpec((1, hiddens), lambda i, j: (0, 0)),
            pl.BlockSpec((hiddens, bn), lambda i, j: (0, j)),
            pl.BlockSpec((1, bn), lambda i, j: (0, j)),
        ],
        out_specs=pl.BlockSpec((bb, bn), lambda i, j: (i, j)),
        scratch_shapes=[pltpu.VMEM((bb, hiddens), compute_dtype)],
    )
    return pl.pallas_call(
        functools.partial(_fnn_streamed_kernel, compute_dtype=compute_dtype),
        out_shape=jax.ShapeDtypeStruct((B, outputs), out_dtype),
        grid_spec=grid_spec,
        # j must stay innermost + "arbitrary" for the hidden-scratch reuse.
        compiler_params=pltpu.CompilerParams(
            dimension_semantics=("parallel", "arbitrary"),
            vmem_limit_bytes=vmem_limit),
        cost_estimate=cost,
    )(x, w1c, b1_2d, w2c, b2_2d)


def fnn_reference(x, w1_t, b1, w2_t, b2, compute_dtype=jnp.bfloat16):
    compute_dtype = jnp.dtype(compute_dtype)
    xc = x.astype(compute_dtype)
    h = jnp.dot(xc, w1_t.astype(compute_dtype),
                preferred_element_type=jnp.float32) + b1.astype(jnp.float32)
    h = jnp.maximum(h, 0.0).astype(compute_dtype)
    y = jnp.dot(h, w2_t.astype(compute_dtype),
                preferred_element_type=jnp.float32) + b2.astype(jnp.float32)
    return y.astype(x.dtype)


if __name__ == "__main__":
    key = jax.random.PRNGKey(0)
    keys = jax.random.split(key, 10)

    # --- Small shapes matching the module (f32 path, exact check). ---------
    batch, inputs, hiddens, outputs = 8, 16, 32, 8
    x = jax.random.normal(keys[0], (batch, inputs), dtype=jnp.float32)
    # PyTorch nn.Linear layout: (out, in); pass pre-transposed (in, out).
    w1 = jax.random.normal(keys[1], (hiddens, inputs), dtype=jnp.float32) * 0.1
    b1 = jax.random.normal(keys[2], (hiddens,), dtype=jnp.float32) * 0.1
    w2 = jax.random.normal(keys[3], (outputs, hiddens), dtype=jnp.float32) * 0.1
    b2 = jax.random.normal(keys[4], (outputs,), dtype=jnp.float32) * 0.1

    out = fnn_forward(x, w1.T, b1, w2.T, b2, compute_dtype=jnp.float32)
    out = jax.block_until_ready(out)
    ref = fnn_reference(x, w1.T, b1, w2.T, b2, compute_dtype=jnp.float32)
    assert out.shape == (batch, outputs)
    assert jnp.allclose(out, ref, atol=1e-5, rtol=1e-5), "f32 mismatch"

    # --- Larger check: resident-W2 path, bf16 operands, 4 batch tiles. -----
    B2, I2, H2, O2 = 512, 256, 512, 384
    x2 = jax.random.normal(keys[5], (B2, I2), dtype=jnp.float32)
    w3 = jax.random.normal(keys[6], (H2, I2), dtype=jnp.float32) * 0.05
    b3 = jax.random.normal(keys[7], (H2,), dtype=jnp.float32) * 0.05
    w4 = jax.random.normal(keys[8], (O2, H2), dtype=jnp.float32) * 0.05
    b4 = jax.random.normal(keys[9], (O2,), dtype=jnp.float32) * 0.05

    out2 = jax.block_until_ready(
        fnn_forward(x2, w3.T, b3, w4.T, b4))  # defaults: bf16, auto (resident)
    ref2 = fnn_reference(x2, w3.T, b3, w4.T, b4, compute_dtype=jnp.bfloat16)
    assert out2.shape == (B2, O2)
    assert jnp.allclose(out2, ref2, atol=2e-2, rtol=2e-2), "bf16 resident mismatch"

    # --- Force the streamed-W2 path (2-D grid + hidden-scratch reuse). -----
    out3 = jax.block_until_ready(
        fnn_forward(x2, w3.T, b3, w4.T, b4, block_batch=256, block_n=128,
                    w2_resident=False))
    assert out3.shape == (B2, O2)
    assert jnp.allclose(out3, ref2, atol=2e-2, rtol=2e-2), "bf16 streamed mismatch"

    print("KERNEL_OK")
</pallas_src>

<mosaic_0001>
module attributes {stable_mosaic.version = 11 : i64} {
  func.func @_fnn_resident_kernel(%arg0: i32, %arg1: memref<8x16xf32, #tpu.memory_space<vmem>>, %arg2: memref<16x32xf32, #tpu.memory_space<vmem>>, %arg3: memref<1x32xf32, #tpu.memory_space<vmem>>, %arg4: memref<32x8xf32, #tpu.memory_space<vmem>>, %arg5: memref<1x8xf32, #tpu.memory_space<vmem>>, %arg6: memref<8x8xf32, #tpu.memory_space<vmem>>) attributes {dimension_semantics = [#tpu.dimension_semantics<parallel>], iteration_bounds = array<i64: 1>, scalar_prefetch = 0 : i64, scratch_operands = 0 : i64, tpu.core_type = #tpu.core_type<tc>, window_params = [{transform_indices = @transform_0, window_bounds = array<i64: 8, 16>}, {pipeline_mode = #tpu.pipeline_mode<synchronous>, transform_indices = @transform_1, window_bounds = array<i64: 16, 32>}, {pipeline_mode = #tpu.pipeline_mode<synchronous>, transform_indices = @transform_2, window_bounds = array<i64: 1, 32>}, {pipeline_mode = #tpu.pipeline_mode<synchronous>, transform_indices = @transform_3, window_bounds = array<i64: 32, 8>}, {pipeline_mode = #tpu.pipeline_mode<synchronous>, transform_indices = @transform_4, window_bounds = array<i64: 1, 8>}, {transform_indices = @transform_5, window_bounds = array<i64: 8, 8>}]} {
    %c0 = arith.constant 0 : index
    %c0_0 = arith.constant 0 : index
    %0 = vector.load %arg1[%c0, %c0_0] : memref<8x16xf32, #tpu.memory_space<vmem>>, vector<8x16xf32>
    %c0_1 = arith.constant 0 : index
    %c0_2 = arith.constant 0 : index
    %1 = vector.load %arg2[%c0_1, %c0_2] : memref<16x32xf32, #tpu.memory_space<vmem>>, vector<16x32xf32>
    %cst = arith.constant dense<0.000000e+00> : vector<8x32xf32>
    %2 = tpu.matmul %0, %1, %cst {dimension_numbers = #tpu.dot_dimension_numbers<[1], [0], [0], [1], [0, 0, 1, 1], [], []>} : vector<8x16xf32>, vector<16x32xf32>, vector<8x32xf32> -> vector<8x32xf32>
    %c0_3 = arith.constant 0 : index
    %c0_4 = arith.constant 0 : index
    %3 = vector.load %arg3[%c0_3, %c0_4] : memref<1x32xf32, #tpu.memory_space<vmem>>, vector<1x32xf32>
    %4 = vector.broadcast %3 : vector<1x32xf32> to vector<8x32xf32>
    %5 = arith.addf %2, %4 : vector<8x32xf32>
    %cst_5 = arith.constant 0.000000e+00 : f32
    %6 = vector.broadcast %cst_5 : f32 to vector<8x32xf32>
    %7 = arith.maximumf %5, %6 : vector<8x32xf32>
    %c0_6 = arith.constant 0 : index
    %c0_7 = arith.constant 0 : index
    %8 = vector.load %arg4[%c0_6, %c0_7] : memref<32x8xf32, #tpu.memory_space<vmem>>, vector<32x8xf32>
    %cst_8 = arith.constant dense<0.000000e+00> : vector<8x8xf32>
    %9 = tpu.matmul %7, %8, %cst_8 {dimension_numbers = #tpu.dot_dimension_numbers<[1], [0], [0], [1], [0, 0, 1, 1], [], []>} : vector<8x32xf32>, vector<32x8xf32>, vector<8x8xf32> -> vector<8x8xf32>
    %c0_9 = arith.constant 0 : index
    %c0_10 = arith.constant 0 : index
    %10 = vector.load %arg5[%c0_9, %c0_10] : memref<1x8xf32, #tpu.memory_space<vmem>>, vector<1x8xf32>
    %11 = vector.broadcast %10 : vector<1x8xf32> to vector<8x8xf32>
    %12 = arith.addf %9, %11 : vector<8x8xf32>
    %c0_11 = arith.constant 0 : index
    %c0_12 = arith.constant 0 : index
    %13 = vector.load %arg6[%c0_11, %c0_12] : memref<8x8xf32, #tpu.memory_space<vmem>>, vector<8x8xf32>
    tpu.vector_store %arg6[%c0_11, %c0_12], %12 {strides = array<i32>} : memref<8x8xf32, #tpu.memory_space<vmem>>, vector<8x8xf32>,
    return
  }
  func.func @transform_0(%arg0: i32) -> (i32, i32) {
    %c0_i32 = arith.constant 0 : i32
    %c0_i32_0 = arith.constant 0 : i32
    return %arg0, %c0_i32 : i32, i32
  }
  func.func @transform_1(%arg0: i32) -> (i32, i32) {
    %c0_i32 = arith.constant 0 : i32
    %c0_i32_0 = arith.constant 0 : i32
    %c0_i32_1 = arith.constant 0 : i32
    return %c0_i32, %c0_i32_0 : i32, i32
  }
  func.func @transform_2(%arg0: i32) -> (i32, i32) {
    %c0_i32 = arith.constant 0 : i32
    %c0_i32_0 = arith.constant 0 : i32
    %c0_i32_1 = arith.constant 0 : i32
    return %c0_i32, %c0_i32_0 : i32, i32
  }
  func.func @transform_3(%arg0: i32) -> (i32, i32) {
    %c0_i32 = arith.constant 0 : i32
    %c0_i32_0 = arith.constant 0 : i32
    %c0_i32_1 = arith.constant 0 : i32
    return %c0_i32, %c0_i32_0 : i32, i32
  }
  func.func @transform_4(%arg0: i32) -> (i32, i32) {
    %c0_i32 = arith.constant 0 : i32
    %c0_i32_0 = arith.constant 0 : i32
    %c0_i32_1 = arith.constant 0 : i32
    return %c0_i32, %c0_i32_0 : i32, i32
  }
  func.func @transform_5(%arg0: i32) -> (i32, i32) {
    %c0_i32 = arith.constant 0 : i32
    %c0_i32_0 = arith.constant 0 : i32
    return %arg0, %c0_i32 : i32, i32
  }
}

</mosaic_0001>

<llo_original>
// kernel: tpu_custom_call.1
$region0: #{tpu_custom_call.1}
  #allocation0 [shape = 'u32[]', space=smem, size = 0x4, offset = 0x4, fixed_abs, tag = 'smem constant byte address 0x4 - core index']
  #allocation1 [shape = 'u32[144,128]{1,0:T(1,128)}', space=vmem, size = 0x12000, scoped, tag = 'internal scratch']
  %s0 = inlined_call_operand.vmem [shape: f32[8,16], index: 0, kind: input, shape index: {}]
  %s1 = inlined_call_operand.vmem [shape: f32[16,32], index: 1, kind: input, shape index: {}]
  %s2 = inlined_call_operand.vmem [shape: f32[1,32], index: 2, kind: input, shape index: {}]
  %s3 = inlined_call_operand.vmem [shape: f32[32,8], index: 3, kind: input, shape index: {}]
  %s4 = inlined_call_operand.vmem [shape: f32[1,8], index: 4, kind: input, shape index: {}]
  %s5 = inlined_call_operand.hbm [shape: f32[8,8], index: 5, kind: output, shape index: {}]
  %s6 = sld [smem:[#allocation0]]
  $region30: #{tpu_custom_call.1} parent=0
    _
  %s8 = ssub.s32 1, %s6
  %s9 = scalar_select 0, %s8, %s6
  $region1: #{tpu_custom_call.1} parent=0
    #allocation2 [shape = 'u8[4096]{0}', space=vmem, size = 0x1000, scoped, tag = 'output window, operand 0, single buffered']
    #allocation3 [shape = 's32[1]{0}', space=sflag, size = 0x4, scoped, tag = 'scoped memory for tpu_custom_call.1']
    %10 = vsyncpa [#allocation3], 0
    // Predicated region
    $region2: #{tpu_custom_call.1} parent=1 // pred_check
      _
    $region3: #{tpu_custom_call.1} parent=1 // pred_check_branch
      %12 = sbr.rel (0) target = $region5
    $region4: #{tpu_custom_call.1} parent=1 // pred_region
      _
    $region5: #{tpu_custom_call.1} parent=1 // pred_fallthru
      _
    // Predicated region
    $region6: #{tpu_custom_call.1} parent=1 // pred_check
      _
    $region7: #{tpu_custom_call.1} parent=1 // pred_check_branch
      %14 = sbr.rel (0) target = $region9
    $region8: #{tpu_custom_call.1} parent=1 // pred_region
      _
    $region9: #{tpu_custom_call.1} parent=1 // pred_fallthru
      _
    // Predicated region
    $region10: #{tpu_custom_call.1} parent=1 // pred_check
      _
    $region11: #{tpu_custom_call.1} parent=1 // pred_check_branch
      %16 = sbr.rel (0) target = $region13
    $region12: #{tpu_custom_call.1} parent=1 // pred_region
      _
    $region13: #{tpu_custom_call.1} parent=1 // pred_fallthru
      _
    // Predicated region
    $region14: #{tpu_custom_call.1} parent=1 // pred_check
      _
    $region15: #{tpu_custom_call.1} parent=1 // pred_check_branch
      %18 = sbr.rel (0) target = $region17
    $region16: #{tpu_custom_call.1} parent=1 // pred_region
      _
    $region17: #{tpu_custom_call.1} parent=1 // pred_fallthru
      _
    // Predicated region
    $region18: #{tpu_custom_call.1} parent=1 // pred_check
      _
    $region19: #{tpu_custom_call.1} parent=1 // pred_check_branch
      %20 = sbr.rel (0) target = $region21
    $region20: #{tpu_custom_call.1} parent=1 // pred_region
      _
    $region21: #{tpu_custom_call.1} parent=1 // pred_fallthru
      _
    %v21 = vld [vmem:[%s0] sm:$0xff]
    %v22 = vld [vmem:[%s1] sm:$0xff]
    %v23 = vld [vmem:[%s1 + $0x8] sm:$0xff]
    %v24 = vld [vmem:[%s2] sm:$0x1]
    %v26 = vlaneseq
    %v27 = vshrl.u32 %v26, 7
    %v28 = vsub.s32 0, %v27
    %v29 = vrot.slane %v24, %v28
    %vm31 = vcmask 130048
    %v33 = vsel %vm31, %v21, 0
    %35 = vmatprep.subr.mxu0 0.0
    %36 = vmatpush1.msra.mxu0 0.0
    %37 = vmatprep.subr.mxu0 0.0
    %38 = vmatpush1.msra.mxu0 0.0
    %39 = vmatprep.subr.mxu0 0.0
    %40 = vmatpush1.msra.mxu0 0.0
    %41 = vmatprep.subr.mxu0 0.0
    %42 = vmatpush1.msra.mxu0 0.0
    %43 = vmatprep.subr.mxu0 0.0
    %44 = vmatpush1.msra.mxu0 0.0
    %45 = vmatprep.subr.mxu0 0.0
    %46 = vmatpush1.msra.mxu0 0.0
    %47 = vmatprep.subr.mxu0 0.0
    %48 = vmatpush1.msra.mxu0 0.0
    %49 = vmatprep.subr.mxu0 0.0
    %50 = vmatpush1.msra.mxu0 0.0
    %51 = vmatprep.subr.mxu0 0.0
    %52 = vmatpush1.msra.mxu0 0.0
    %53 = vmatprep.subr.mxu0 0.0
    %54 = vmatpush1.msra.mxu0 0.0
    %55 = vmatprep.subr.mxu0 0.0
    %56 = vmatpush1.msra.mxu0 0.0
    %57 = vmatprep.subr.mxu0 0.0
    %58 = vmatpush1.msra.mxu0 0.0
    %59 = vmatprep.subr.mxu0 0.0
    %60 = vmatpush1.msra.mxu0 0.0
    %61 = vmatprep.subr.mxu0 0.0
    %62 = vmatpush1.msra.mxu0 0.0
    %63 = vmatprep.subr.mxu0 0.0
    %64 = vmatpush1.msra.mxu0 %v23
    %65 = vmatprep.subr.mxu0 0.0
    %66 = vmatpush1.msra.mxu0 %v22
    %67 = vmatprep.subr.mxu0 0.0
    %68 = vmatpush2.msra.mxu0 0.0
    %69 = vmatprep.subr.mxu0 0.0
    %70 = vmatpush2.msra.mxu0 0.0
    %71 = vmatprep.subr.mxu0 0.0
    %72 = vmatpush2.msra.mxu0 0.0
    %73 = vmatprep.subr.mxu0 0.0
    %74 = vmatpush2.msra.mxu0 0.0
    %75 = vmatprep.subr.mxu0 0.0
    %76 = vmatpush2.msra.mxu0 0.0
    %77 = vmatprep.subr.mxu0 0.0
    %78 = vmatpush2.msra.mxu0 0.0
    %79 = vmatprep.subr.mxu0 0.0
    %80 = vmatpush2.msra.mxu0 0.0
    %81 = vmatprep.subr.mxu0 0.0
    %82 = vmatpush2.msra.mxu0 0.0
    %83 = vmatprep.subr.mxu0 0.0
    %84 = vmatpush2.msra.mxu0 0.0
    %85 = vmatprep.subr.mxu0 0.0
    %86 = vmatpush2.msra.mxu0 0.0
    %87 = vmatprep.subr.mxu0 0.0
    %88 = vmatpush2.msra.mxu0 0.0
    %89 = vmatprep.subr.mxu0 0.0
    %90 = vmatpush2.msra.mxu0 0.0
    %91 = vmatprep.subr.mxu0 0.0
    %92 = vmatpush2.msra.mxu0 0.0
    %93 = vmatprep.subr.mxu0 0.0
    %94 = vmatpush2.msra.mxu0 0.0
    %95 = vmatprep.subr.mxu0 0.0
    %96 = vmatpush2.msra.mxu0 0.0
    %97 = vmatprep.subr.mxu0 0.0
    %98 = vmatpush2.msra.mxu0 0.0
    %99 = vmatprep.mubr.f32.mxu0 0.0
    %100 = vmatmul.mubr.f32.gmra.mxu0 %v33
    %v101 = vpop.f32.mrf.mxu0
    %v102 = vadd.f32 %v29, %v101
    %v103 = vpop.f32.mrf.mxu0
    %104 = vdwg.mxu0
    %v105 = vmax.f32 %v102, 0.0
    %v106 = vld [vmem:[%s3] sm:$0xff]
    %v107 = vld [vmem:[%s3 + $0x8] sm:$0xff]
    %v108 = vld [vmem:[%s3 + $0x10] sm:$0xff]
    %v109 = vld [vmem:[%s3 + $0x18] sm:$0xff]
    %v110 = vld [vmem:[%s4] sm:$0x1]
    %v112 = vlaneseq
    %v113 = vshrl.u32 %v112, 7
    %v114 = vsub.s32 0, %v113
    %v115 = vrot.slane %v110, %v114
    %vm117 = vcmask 261120
    %v119 = vsel %vm117, %v105, 0
    %121 = vmatprep.subr.mxu0 0.0
    %122 = vmatpush1.msra.mxu0 0.0
    %123 = vmatprep.subr.mxu0 0.0
    %124 = vmatpush1.msra.mxu0 0.0
    %125 = vmatprep.subr.mxu0 0.0
    %126 = vmatpush1.msra.mxu0 0.0
    %127 = vmatprep.subr.mxu0 0.0
    %128 = vmatpush1.msra.mxu0 0.0
    %129 = vmatprep.subr.mxu0 0.0
    %130 = vmatpush1.msra.mxu0 0.0
    %131 = vmatprep.subr.mxu0 0.0
    %132 = vmatpush1.msra.mxu0 0.0
    %133 = vmatprep.subr.mxu0 0.0
    %134 = vmatpush1.msra.mxu0 0.0
    %135 = vmatprep.subr.mxu0 0.0
    %136 = vmatpush1.msra.mxu0 0.0
    %137 = vmatprep.subr.mxu0 0.0
    %138 = vmatpush1.msra.mxu0 0.0
    %139 = vmatprep.subr.mxu0 0.0
    %140 = vmatpush1.msra.mxu0 0.0
    %141 = vmatprep.subr.mxu0 0.0
    %142 = vmatpush1.msra.mxu0 0.0
    %143 = vmatprep.subr.mxu0 0.0
    %144 = vmatpush1.msra.mxu0 0.0
    %145 = vmatprep.subr.mxu0 0.0
    %146 = vmatpush1.msra.mxu0 %v109
    %147 = vmatprep.subr.mxu0 0.0
    %148 = vmatpush1.msra.mxu0 %v108
    %149 = vmatprep.subr.mxu0 0.0
    %150 = vmatpush1.msra.mxu0 %v107
    %151 = vmatprep.subr.mxu0 0.0
    %152 = vmatpush1.msra.mxu0 %v106
    %153 = vmatprep.subr.mxu0 0.0
    %154 = vmatpush2.msra.mxu0 0.0
    %155 = vmatprep.subr.mxu0 0.0
    %156 = vmatpush2.msra.mxu0 0.0
    %157 = vmatprep.subr.mxu0 0.0
    %158 = vmatpush2.msra.mxu0 0.0
    %159 = vmatprep.subr.mxu0 0.0
    %160 = vmatpush2.msra.mxu0 0.0
    %161 = vmatprep.subr.mxu0 0.0
    %162 = vmatpush2.msra.mxu0 0.0
    %163 = vmatprep.subr.mxu0 0.0
    %164 = vmatpush2.msra.mxu0 0.0
    %165 = vmatprep.subr.mxu0 0.0
    %166 = vmatpush2.msra.mxu0 0.0
    %167 = vmatprep.subr.mxu0 0.0
    %168 = vmatpush2.msra.mxu0 0.0
    %169 = vmatprep.subr.mxu0 0.0
    %170 = vmatpush2.msra.mxu0 0.0
    %171 = vmatprep.subr.mxu0 0.0
    %172 = vmatpush2.msra.mxu0 0.0
    %173 = vmatprep.subr.mxu0 0.0
    %174 = vmatpush2.msra.mxu0 0.0
    %175 = vmatprep.subr.mxu0 0.0
    %176 = vmatpush2.msra.mxu0 0.0
    %177 = vmatprep.subr.mxu0 0.0
    %178 = vmatpush2.msra.mxu0 0.0
    %179 = vmatprep.subr.mxu0 0.0
    %180 = vmatpush2.msra.mxu0 0.0
    %181 = vmatprep.subr.mxu0 0.0
    %182 = vmatpush2.msra.mxu0 0.0
    %183 = vmatprep.subr.mxu0 0.0
    %184 = vmatpush2.msra.mxu0 0.0
    %185 = vmatprep.mubr.f32.mxu0 0.0
    %186 = vmatmul.mubr.f32.gmra.mxu0 %v119
    %v187 = vpop.f32.mrf.mxu0
    %v188 = vadd.f32 %v115, %v187
    %v189 = vpop.f32.mrf.mxu0
    %190 = vdwg.mxu0
    %vm191 = vcmask 64512
    %192 = vst.msk [vmem:[#allocation2] sm:$0xff] %vm191, %v188
    // Predicated region
    $region22: #{tpu_custom_call.1} parent=1 // pred_check
      _
    $region23: #{tpu_custom_call.1} parent=1 // pred_check_branch
      %194 = sbr.rel (0) target = $region25
    $region24: #{tpu_custom_call.1} parent=1 // pred_region
      %s196 = ssub.s32 128, 128
      %197 = vsyncadd [#allocation3], %s196
      %s199 = sshll.u32 [#allocation2], 4
      %s200 = int_to_ptr.vmem [resolvable:$true] %s199
      %202 = dma.vmem_to_hbm [thread:$0]  %s200, 128, %s5, [#allocation3]
    $region25: #{tpu_custom_call.1} parent=1 // pred_fallthru
      _
    // Predicated region
    $region26: #{tpu_custom_call.1} parent=1 // pred_check
      _
    $region27: #{tpu_custom_call.1} parent=1 // pred_check_branch
      %204 = sbr.rel (0) target = $region29
    $region28: #{tpu_custom_call.1} parent=1 // pred_region
      %205 = dma.done [#allocation3], 128
    $region29: #{tpu_custom_call.1} parent=1 // pred_fallthru
      _
    %206 = vsyncpa [#allocation3], 1

</llo_original>
